<compile_context>
chip_gen: v5e
topology: v5e:2x2
jax: 0.10.0
libtpu: 0.0.40
codegen_flags: <defaults>
</compile_context>

<pallas_src>
import math

import jax
import jax.numpy as jnp
from jax import lax
from jax.experimental import pallas as pl
from jax.experimental.pallas import tpu as pltpu


_NEG_INF = -1e30   # finite f32 mask fill (never downcast to bf16)


def _seq_tile(T):
    """Largest convenient sequence tile that evenly divides T."""
    for t in (256, 128):
        if T % t == 0:
            return t
    return T        # small / odd T: whole sequence as one tile


def _vmem_limit_bytes():
    """Raise the scoped VMEM limit, leaving headroom on every chip gen."""
    try:
        cap = pltpu.get_tpu_info().vmem_capacity_bytes
        return min(96 * 1024 * 1024, int(cap) * 3 // 4)
    except Exception:
        return None     # fall back to the compiler default


def _layernorm(x, g, b, eps=1e-5):
    mu = jnp.mean(x, axis=-1, keepdims=True)
    var = jnp.mean((x - mu) ** 2, axis=-1, keepdims=True)
    return (x - mu) * lax.rsqrt(var + eps) * g + b


def _gelu_tanh(x):
    c = math.sqrt(2.0 / math.pi)
    return 0.5 * x * (1.0 + jnp.tanh(c * (x + 0.044715 * x * x * x)))


# ---------------------------------------------------------------------------
# Kernel 1: ln_1 + fused QKV projection  ->  head-major Q/K/V (bf16)
#   grid = (B, T // tq)
# ---------------------------------------------------------------------------
def ln1_qkv_kernel(x_ref, g_ref, b_ref, wqkv_ref, bqkv_ref,
                   q_ref, k_ref, v_ref):
    x = x_ref[0]                                   # (tq, C) f32
    C = x.shape[-1]
    n_head = q_ref.shape[1]
    hd = q_ref.shape[3]

    h = _layernorm(x, g_ref[0], b_ref[0])          # f32
    qkv = jnp.dot(h.astype(jnp.bfloat16), wqkv_ref[...],
                  preferred_element_type=jnp.float32) + bqkv_ref[0]  # (tq, 3C) f32

    # Scatter into head-major layout; O(T*C) layout work, negligible vs matmul.
    for hi in range(n_head):
        lo = hi * hd
        q_ref[0, hi] = qkv[:, lo:lo + hd].astype(jnp.bfloat16)
        k_ref[0, hi] = qkv[:, C + lo:C + lo + hd].astype(jnp.bfloat16)
        v_ref[0, hi] = qkv[:, 2 * C + lo:2 * C + lo + hd].astype(jnp.bfloat16)


# ---------------------------------------------------------------------------
# Kernel 2: flash-style causal attention with online softmax
#   grid = (B, H, T // tq, T // tk); kv axis is the "arbitrary" reduction
# ---------------------------------------------------------------------------
def flash_attn_kernel(q_ref, k_ref, v_ref, y_ref, m_sc, l_sc, acc_sc):
    tq, hd = q_ref.shape[2], q_ref.shape[3]
    tk = k_ref.shape[2]
    scale = 1.0 / math.sqrt(hd)

    qi = pl.program_id(2)
    ki = pl.program_id(3)

    @pl.when(ki == 0)
    def _init():
        m_sc[...] = jnp.full(m_sc.shape, -jnp.inf, jnp.float32)
        l_sc[...] = jnp.zeros(l_sc.shape, jnp.float32)
        acc_sc[...] = jnp.zeros(acc_sc.shape, jnp.float32)

    # Skip kv tiles that lie entirely above the causal diagonal.
    @pl.when(ki * tk <= qi * tq + (tq - 1))
    def _update():
        q = q_ref[0, 0]                            # (tq, hd) bf16
        k = k_ref[0, 0]                            # (tk, hd) bf16
        # q @ k^T without materializing a transpose (contract last dims).
        s = lax.dot_general(q, k, (((1,), (1,)), ((), ())),
                            preferred_element_type=jnp.float32) * scale  # (tq, tk) f32

        # Per-tile causal mask:  (qi*tq + r) >= (ki*tk + c)  <=>  r - c >= thr
        row = lax.broadcasted_iota(jnp.int32, (tq, tk), 0)
        col = lax.broadcasted_iota(jnp.int32, (tq, tk), 1)
        causal = (row - col) >= (ki * tk - qi * tq)
        s = jnp.where(causal, s, _NEG_INF)         # mask in f32

        m_prev = m_sc[...]
        m_new = jnp.maximum(m_prev, jnp.max(s, axis=-1, keepdims=True))
        alpha = jnp.exp(m_prev - m_new)
        p = jnp.exp(s - m_new)

        l_sc[...] = alpha * l_sc[...] + jnp.sum(p, axis=-1, keepdims=True)
        acc_sc[...] = alpha * acc_sc[...] + jnp.dot(
            p.astype(jnp.bfloat16), v_ref[0, 0],
            preferred_element_type=jnp.float32)
        m_sc[...] = m_new

    @pl.when(ki == pl.num_programs(3) - 1)
    def _finalize():
        inv_l = pl.reciprocal(l_sc[...], approx=True)
        y_ref[0, 0] = (acc_sc[...] * inv_l).astype(y_ref.dtype)


# ---------------------------------------------------------------------------
# Kernel 3: head merge + attn c_proj + residual + ln_2 + MLP + residual
#   grid = (B, T // tq)
# ---------------------------------------------------------------------------
def merge_proj_mlp_kernel(y_ref, x_ref, wap_ref, bap_ref,
                          g2_ref, b2_ref, wfc_ref, bfc_ref,
                          wmp_ref, bmp_ref, out_ref):
    x = x_ref[0]                                   # (tq, C) f32
    n_head = y_ref.shape[1]

    # Head merge fused into c_proj:  concat_h(y_h) @ Wap == sum_h y_h @ Wap_h
    # -> lane-dense (tq, C) accumulation, no concatenate / relayout.
    proj = jnp.zeros_like(x)
    for hi in range(n_head):
        proj = proj + jnp.dot(y_ref[0, hi], wap_ref[hi],
                              preferred_element_type=jnp.float32)
    x1 = x + proj + bap_ref[0]

    h2 = _layernorm(x1, g2_ref[0], b2_ref[0])
    f = jnp.dot(h2.astype(jnp.bfloat16), wfc_ref[...],
                preferred_element_type=jnp.float32) + bfc_ref[0]
    f = _gelu_tanh(f)                              # f32
    m = jnp.dot(f.astype(jnp.bfloat16), wmp_ref[...],
                preferred_element_type=jnp.float32) + bmp_ref[0]

    out_ref[0] = x1 + m


# ---------------------------------------------------------------------------
# Wrapper
# ---------------------------------------------------------------------------
def gpt_block(x, params, n_head):
    (ln1_g, ln1_b, wqkv, bqkv, wap, bap,
     ln2_g, ln2_b, wfc, bfc, wmp, bmp) = params
    B, T, C = x.shape
    H = n_head
    assert C % H == 0
    hd = C // H

    tq = _seq_tile(T)
    tk = tq
    nq = T // tq
    nk = T // tk

    bf16 = jnp.bfloat16
    wqkv_b = wqkv.astype(bf16)                      # (C, 3C)
    wap_h = wap.reshape(H, hd, C).astype(bf16)      # per-head rows of attn c_proj
    wfc_b = wfc.astype(bf16)                        # (C, 4C)
    wmp_b = wmp.astype(bf16)                        # (4C, C)

    vmem_limit = _vmem_limit_bytes()

    def const2(shape):   # weight/bias resident across the (B, seq-tile) grid
        return pl.BlockSpec(shape, lambda b, i: (0,) * len(shape))

    cparams2 = pltpu.CompilerParams(
        dimension_semantics=("parallel", "parallel"),
        vmem_limit_bytes=vmem_limit)

    head_major_spec = pl.BlockSpec((1, H, tq, hd), lambda b, i: (b, 0, i, 0))

    # ---- kernel 1: ln_1 + QKV projection --------------------------------
    qkv_struct = jax.ShapeDtypeStruct((B, H, T, hd), bf16)
    q, k, v = pl.pallas_call(
        ln1_qkv_kernel,
        out_shape=(qkv_struct, qkv_struct, qkv_struct),
        grid_spec=pltpu.PrefetchScalarGridSpec(
            num_scalar_prefetch=0,
            grid=(B, nq),
            in_specs=[
                pl.BlockSpec((1, tq, C), lambda b, i: (b, i, 0)),   # x
                const2((1, C)), const2((1, C)),                     # ln1 gamma/beta
                const2((C, 3 * C)), const2((1, 3 * C)),             # c_attn W (bf16), b
            ],
            out_specs=[head_major_spec, head_major_spec, head_major_spec],
        ),
        compiler_params=cparams2,
    )(x, ln1_g, ln1_b, wqkv_b, bqkv)

    # ---- kernel 2: flash attention ---------------------------------------
    y = pl.pallas_call(
        flash_attn_kernel,
        out_shape=jax.ShapeDtypeStruct((B, H, T, hd), bf16),
        grid_spec=pltpu.PrefetchScalarGridSpec(
            num_scalar_prefetch=0,
            grid=(B, H, nq, nk),
            in_specs=[
                pl.BlockSpec((1, 1, tq, hd), lambda b, h, i, j: (b, h, i, 0)),
                pl.BlockSpec((1, 1, tk, hd), lambda b, h, i, j: (b, h, j, 0)),
                pl.BlockSpec((1, 1, tk, hd), lambda b, h, i, j: (b, h, j, 0)),
            ],
            out_specs=pl.BlockSpec((1, 1, tq, hd), lambda b, h, i, j: (b, h, i, 0)),
            scratch_shapes=[
                pltpu.VMEM((tq, 1), jnp.float32),    # running max
                pltpu.VMEM((tq, 1), jnp.float32),    # running denom
                pltpu.VMEM((tq, hd), jnp.float32),   # output accumulator
            ],
        ),
        compiler_params=pltpu.CompilerParams(
            dimension_semantics=("parallel", "parallel", "parallel", "arbitrary"),
            vmem_limit_bytes=vmem_limit),
    )(q, k, v)

    # ---- kernel 3: merge + c_proj + residual + ln_2 + MLP + residual -----
    out = pl.pallas_call(
        merge_proj_mlp_kernel,
        out_shape=jax.ShapeDtypeStruct((B, T, C), jnp.float32),
        grid_spec=pltpu.PrefetchScalarGridSpec(
            num_scalar_prefetch=0,
            grid=(B, nq),
            in_specs=[
                head_major_spec,                                   # y (attn heads)
                pl.BlockSpec((1, tq, C), lambda b, i: (b, i, 0)),  # x (residual)
                const2((H, hd, C)), const2((1, C)),                # attn c_proj W,b
                const2((1, C)), const2((1, C)),                    # ln2 gamma/beta
                const2((C, 4 * C)), const2((1, 4 * C)),            # mlp c_fc W,b
                const2((4 * C, C)), const2((1, C)),                # mlp c_proj W,b
            ],
            out_specs=pl.BlockSpec((1, tq, C), lambda b, i: (b, i, 0)),
        ),
        compiler_params=cparams2,
    )(y, x, wap_h, bap, ln2_g, ln2_b, wfc_b, bfc, wmp_b, bmp)

    return out


# ---------------------------------------------------------------------------
# Pure-JAX f32 reference (mirrors the PyTorch forward exactly)
# ---------------------------------------------------------------------------
def gpt_block_ref(x, params, n_head):
    (ln1_g, ln1_b, wqkv, bqkv, wap, bap,
     ln2_g, ln2_b, wfc, bfc, wmp, bmp) = params
    B, T, C = x.shape
    hd = C // n_head

    def ln(v, g, b):
        mu = jnp.mean(v, -1, keepdims=True)
        var = jnp.mean((v - mu) ** 2, -1, keepdims=True)
        return (v - mu) / jnp.sqrt(var + 1e-5) * g[0] + b[0]

    h = ln(x, ln1_g, ln1_b)
    qkv = h @ wqkv + bqkv[0]
    q, k, v = jnp.split(qkv, 3, axis=-1)
    q = q.reshape(B, T, n_head, hd).transpose(0, 2, 1, 3)
    k = k.reshape(B, T, n_head, hd).transpose(0, 2, 1, 3)
    v = v.reshape(B, T, n_head, hd).transpose(0, 2, 1, 3)
    s = jnp.einsum('bhtd,bhsd->bhts', q, k) / math.sqrt(hd)
    mask = jnp.tril(jnp.ones((T, T), dtype=bool))
    s = jnp.where(mask[None, None], s, -jnp.inf)
    p = jax.nn.softmax(s, axis=-1)
    y = jnp.einsum('bhts,bhsd->bhtd', p, v).transpose(0, 2, 1, 3).reshape(B, T, C)
    x1 = x + (y @ wap + bap[0])

    h2 = ln(x1, ln2_g, ln2_b)
    f = h2 @ wfc + bfc[0]
    f = 0.5 * f * (1.0 + jnp.tanh(math.sqrt(2.0 / math.pi) * (f + 0.044715 * f ** 3)))
    return x1 + (f @ wmp + bmp[0])


# ---------------------------------------------------------------------------
# Main
# ---------------------------------------------------------------------------
if __name__ == "__main__":
    B, T, C, n_head = 2, 8, 32, 4

    key = jax.random.PRNGKey(0)
    ks = jax.random.split(key, 9)

    def init_w(k, fan_in, shape):
        bound = 1.0 / math.sqrt(fan_in)
        return jax.random.uniform(k, shape, jnp.float32, -bound, bound)

    params = (
        jnp.ones((1, C), jnp.float32),                    # ln1 gamma
        jnp.zeros((1, C), jnp.float32),                   # ln1 beta
        init_w(ks[0], C, (C, 3 * C)),                     # c_attn W
        init_w(ks[1], C, (1, 3 * C)),                     # c_attn b
        init_w(ks[2], C, (C, C)),                         # attn c_proj W
        init_w(ks[3], C, (1, C)),                         # attn c_proj b
        jnp.ones((1, C), jnp.float32),                    # ln2 gamma
        jnp.zeros((1, C), jnp.float32),                   # ln2 beta
        init_w(ks[4], C, (C, 4 * C)),                     # mlp c_fc W
        init_w(ks[5], C, (1, 4 * C)),                     # mlp c_fc b
        init_w(ks[6], 4 * C, (4 * C, C)),                 # mlp c_proj W
        init_w(ks[7], 4 * C, (1, C)),                     # mlp c_proj b
    )

    x = jax.random.normal(ks[8], (B, T, C), jnp.float32)

    out = jax.block_until_ready(gpt_block(x, params, n_head))
    ref = jax.block_until_ready(gpt_block_ref(x, params, n_head))

    assert out.shape == (B, T, C)
    # bf16 MXU inputs + approx reciprocal -> loosen tolerance vs f32 reference.
    err = float(jnp.max(jnp.abs(out - ref)))
    assert jnp.allclose(out, ref, atol=5e-2, rtol=5e-2), f"max abs err = {err}"

    print("KERNEL_OK")
</pallas_src>

<mosaic_0001>
module attributes {stable_mosaic.version = 11 : i64} {
  func.func @ln1_qkv_kernel(%arg0: i32, %arg1: i32, %arg2: memref<1x8x32xf32, #tpu.memory_space<vmem>>, %arg3: memref<1x32xf32, #tpu.memory_space<vmem>>, %arg4: memref<1x32xf32, #tpu.memory_space<vmem>>, %arg5: memref<32x96xbf16, #tpu.memory_space<vmem>>, %arg6: memref<1x96xf32, #tpu.memory_space<vmem>>, %arg7: memref<1x4x8x8xbf16, #tpu.memory_space<vmem>>, %arg8: memref<1x4x8x8xbf16, #tpu.memory_space<vmem>>, %arg9: memref<1x4x8x8xbf16, #tpu.memory_space<vmem>>) attributes {dimension_semantics = [#tpu.dimension_semantics<parallel>, #tpu.dimension_semantics<parallel>], iteration_bounds = array<i64: 2, 1>, scalar_prefetch = 0 : i64, scratch_operands = 0 : i64, tpu.core_type = #tpu.core_type<tc>, window_params = [{transform_indices = @transform_0, window_bounds = array<i64: 1, 8, 32>}, {pipeline_mode = #tpu.pipeline_mode<synchronous>, transform_indices = @transform_1, window_bounds = array<i64: 1, 32>}, {pipeline_mode = #tpu.pipeline_mode<synchronous>, transform_indices = @transform_2, window_bounds = array<i64: 1, 32>}, {pipeline_mode = #tpu.pipeline_mode<synchronous>, transform_indices = @transform_3, window_bounds = array<i64: 32, 96>}, {pipeline_mode = #tpu.pipeline_mode<synchronous>, transform_indices = @transform_4, window_bounds = array<i64: 1, 96>}, {transform_indices = @transform_5, window_bounds = array<i64: 1, 4, 8, 8>}, {transform_indices = @transform_6, window_bounds = array<i64: 1, 4, 8, 8>}, {transform_indices = @transform_7, window_bounds = array<i64: 1, 4, 8, 8>}]} {
    %c0 = arith.constant 0 : index
    %c0_0 = arith.constant 0 : index
    %c0_1 = arith.constant 0 : index
    %0 = vector.load %arg2[%c0, %c0_0, %c0_1] : memref<1x8x32xf32, #tpu.memory_space<vmem>>, vector<1x8x32xf32>
    %1 = vector.shape_cast %0 : vector<1x8x32xf32> to vector<8x32xf32>
    %c0_2 = arith.constant 0 : index
    %c0_3 = arith.constant 0 : index
    %2 = vector.load %arg3[%c0_2, %c0_3] : memref<1x32xf32, #tpu.memory_space<vmem>>, vector<1x32xf32>
    %3 = vector.shape_cast %2 : vector<1x32xf32> to vector<32xf32>
    %c0_4 = arith.constant 0 : index
    %c0_5 = arith.constant 0 : index
    %4 = vector.load %arg4[%c0_4, %c0_5] : memref<1x32xf32, #tpu.memory_space<vmem>>, vector<1x32xf32>
    %5 = vector.shape_cast %4 : vector<1x32xf32> to vector<32xf32>
    %cst = arith.constant dense<0.000000e+00> : vector<8xf32>
    %6 = vector.multi_reduction <add>, %1, %cst [1] : vector<8x32xf32> to vector<8xf32>
    %7 = vector.shape_cast %6 : vector<8xf32> to vector<8x1xf32>
    %cst_6 = arith.constant 3.200000e+01 : f32
    %8 = vector.broadcast %cst_6 : f32 to vector<8x1xf32>
    %9 = arith.divf %7, %8 : vector<8x1xf32>
    %10 = vector.broadcast %9 : vector<8x1xf32> to vector<8x32xf32>
    %11 = arith.subf %1, %10 : vector<8x32xf32>
    %12 = arith.mulf %11, %11 : vector<8x32xf32>
    %cst_7 = arith.constant dense<0.000000e+00> : vector<8xf32>
    %13 = vector.multi_reduction <add>, %12, %cst_7 [1] : vector<8x32xf32> to vector<8xf32>
    %14 = vector.shape_cast %13 : vector<8xf32> to vector<8x1xf32>
    %cst_8 = arith.constant 3.200000e+01 : f32
    %15 = vector.broadcast %cst_8 : f32 to vector<8x1xf32>
    %16 = arith.divf %14, %15 : vector<8x1xf32>
    %17 = vector.broadcast %9 : vector<8x1xf32> to vector<8x32xf32>
    %18 = arith.subf %1, %17 : vector<8x32xf32>
    %cst_9 = arith.constant 9.99999974E-6 : f32
    %19 = vector.broadcast %cst_9 : f32 to vector<8x1xf32>
    %20 = arith.addf %16, %19 : vector<8x1xf32>
    %21 = math.rsqrt %20 : vector<8x1xf32>
    %22 = vector.broadcast %21 : vector<8x1xf32> to vector<8x32xf32>
    %23 = arith.mulf %18, %22 : vector<8x32xf32>
    %24 = vector.shape_cast %3 : vector<32xf32> to vector<1x32xf32>
    %25 = vector.broadcast %24 : vector<1x32xf32> to vector<8x32xf32>
    %26 = arith.mulf %23, %25 : vector<8x32xf32>
    %27 = vector.shape_cast %5 : vector<32xf32> to vector<1x32xf32>
    %28 = vector.broadcast %27 : vector<1x32xf32> to vector<8x32xf32>
    %29 = arith.addf %26, %28 : vector<8x32xf32>
    %30 = arith.truncf %29 : vector<8x32xf32> to vector<8x32xbf16>
    %c0_10 = arith.constant 0 : index
    %c0_11 = arith.constant 0 : index
    %31 = vector.load %arg5[%c0_10, %c0_11] : memref<32x96xbf16, #tpu.memory_space<vmem>>, vector<32x96xbf16>
    %cst_12 = arith.constant dense<0.000000e+00> : vector<8x96xf32>
    %32 = tpu.matmul %30, %31, %cst_12 {dimension_numbers = #tpu.dot_dimension_numbers<[1], [0], [0], [1], [0, 0, 1, 1], [], []>} : vector<8x32xbf16>, vector<32x96xbf16>, vector<8x96xf32> -> vector<8x96xf32>
    %c0_13 = arith.constant 0 : index
    %c0_14 = arith.constant 0 : index
    %33 = vector.load %arg6[%c0_13, %c0_14] : memref<1x96xf32, #tpu.memory_space<vmem>>, vector<1x96xf32>
    %34 = vector.shape_cast %33 : vector<1x96xf32> to vector<96xf32>
    %35 = vector.shape_cast %34 : vector<96xf32> to vector<1x96xf32>
    %36 = vector.broadcast %35 : vector<1x96xf32> to vector<8x96xf32>
    %37 = arith.addf %32, %36 : vector<8x96xf32>
    %38 = vector.extract_strided_slice %37 {offsets = [0, 0], sizes = [8, 8], strides = [1, 1]} : vector<8x96xf32> to vector<8x8xf32>
    %39 = arith.truncf %38 : vector<8x8xf32> to vector<8x8xbf16>
    %c0_15 = arith.constant 0 : index
    %c0_16 = arith.constant 0 : index
    %c0_17 = arith.constant 0 : index
    %c0_18 = arith.constant 0 : index
    %40 = vector.load %arg7[%c0_15, %c0_16, %c0_17, %c0_18] : memref<1x4x8x8xbf16, #tpu.memory_space<vmem>>, vector<1x1x8x8xbf16>
    %41 = vector.shape_cast %40 : vector<1x1x8x8xbf16> to vector<8x8xbf16>
    %42 = vector.shape_cast %39 : vector<8x8xbf16> to vector<1x1x8x8xbf16>
    tpu.vector_store %arg7[%c0_15, %c0_16, %c0_17, %c0_18], %42 {strides = array<i32>} : memref<1x4x8x8xbf16, #tpu.memory_space<vmem>>, vector<1x1x8x8xbf16>,
    %43 = vector.extract_strided_slice %37 {offsets = [0, 32], sizes = [8, 8], strides = [1, 1]} : vector<8x96xf32> to vector<8x8xf32>
    %44 = arith.truncf %43 : vector<8x8xf32> to vector<8x8xbf16>
    %c0_19 = arith.constant 0 : index
    %c0_20 = arith.constant 0 : index
    %c0_21 = arith.constant 0 : index
    %c0_22 = arith.constant 0 : index
    %45 = vector.load %arg8[%c0_19, %c0_20, %c0_21, %c0_22] : memref<1x4x8x8xbf16, #tpu.memory_space<vmem>>, vector<1x1x8x8xbf16>
    %46 = vector.shape_cast %45 : vector<1x1x8x8xbf16> to vector<8x8xbf16>
    %47 = vector.shape_cast %44 : vector<8x8xbf16> to vector<1x1x8x8xbf16>
    tpu.vector_store %arg8[%c0_19, %c0_20, %c0_21, %c0_22], %47 {strides = array<i32>} : memref<1x4x8x8xbf16, #tpu.memory_space<vmem>>, vector<1x1x8x8xbf16>,
    %48 = vector.extract_strided_slice %37 {offsets = [0, 64], sizes = [8, 8], strides = [1, 1]} : vector<8x96xf32> to vector<8x8xf32>
    %49 = arith.truncf %48 : vector<8x8xf32> to vector<8x8xbf16>
    %c0_23 = arith.constant 0 : index
    %c0_24 = arith.constant 0 : index
    %c0_25 = arith.constant 0 : index
    %c0_26 = arith.constant 0 : index
    %50 = vector.load %arg9[%c0_23, %c0_24, %c0_25, %c0_26] : memref<1x4x8x8xbf16, #tpu.memory_space<vmem>>, vector<1x1x8x8xbf16>
    %51 = vector.shape_cast %50 : vector<1x1x8x8xbf16> to vector<8x8xbf16>
    %52 = vector.shape_cast %49 : vector<8x8xbf16> to vector<1x1x8x8xbf16>
    tpu.vector_store %arg9[%c0_23, %c0_24, %c0_25, %c0_26], %52 {strides = array<i32>} : memref<1x4x8x8xbf16, #tpu.memory_space<vmem>>, vector<1x1x8x8xbf16>,
    %53 = vector.extract_strided_slice %37 {offsets = [0, 8], sizes = [8, 8], strides = [1, 1]} : vector<8x96xf32> to vector<8x8xf32>
    %54 = arith.truncf %53 : vector<8x8xf32> to vector<8x8xbf16>
    %c0_27 = arith.constant 0 : index
    %c1 = arith.constant 1 : index
    %c0_28 = arith.constant 0 : index
    %c0_29 = arith.constant 0 : index
    %55 = vector.load %arg7[%c0_27, %c1, %c0_28, %c0_29] : memref<1x4x8x8xbf16, #tpu.memory_space<vmem>>, vector<1x1x8x8xbf16>
    %56 = vector.shape_cast %55 : vector<1x1x8x8xbf16> to vector<8x8xbf16>
    %57 = vector.shape_cast %54 : vector<8x8xbf16> to vector<1x1x8x8xbf16>
    tpu.vector_store %arg7[%c0_27, %c1, %c0_28, %c0_29], %57 {strides = array<i32>} : memref<1x4x8x8xbf16, #tpu.memory_space<vmem>>, vector<1x1x8x8xbf16>,
    %58 = vector.extract_strided_slice %37 {offsets = [0, 40], sizes = [8, 8], strides = [1, 1]} : vector<8x96xf32> to vector<8x8xf32>
    %59 = arith.truncf %58 : vector<8x8xf32> to vector<8x8xbf16>
    %c0_30 = arith.constant 0 : index
    %c1_31 = arith.constant 1 : index
    %c0_32 = arith.constant 0 : index
    %c0_33 = arith.constant 0 : index
    %60 = vector.load %arg8[%c0_30, %c1_31, %c0_32, %c0_33] : memref<1x4x8x8xbf16, #tpu.memory_space<vmem>>, vector<1x1x8x8xbf16>
    %61 = vector.shape_cast %60 : vector<1x1x8x8xbf16> to vector<8x8xbf16>
    %62 = vector.shape_cast %59 : vector<8x8xbf16> to vector<1x1x8x8xbf16>
    tpu.vector_store %arg8[%c0_30, %c1_31, %c0_32, %c0_33], %62 {strides = array<i32>} : memref<1x4x8x8xbf16, #tpu.memory_space<vmem>>, vector<1x1x8x8xbf16>,
    %63 = vector.extract_strided_slice %37 {offsets = [0, 72], sizes = [8, 8], strides = [1, 1]} : vector<8x96xf32> to vector<8x8xf32>
    %64 = arith.truncf %63 : vector<8x8xf32> to vector<8x8xbf16>
    %c0_34 = arith.constant 0 : index
    %c1_35 = arith.constant 1 : index
    %c0_36 = arith.constant 0 : index
    %c0_37 = arith.constant 0 : index
    %65 = vector.load %arg9[%c0_34, %c1_35, %c0_36, %c0_37] : memref<1x4x8x8xbf16, #tpu.memory_space<vmem>>, vector<1x1x8x8xbf16>
    %66 = vector.shape_cast %65 : vector<1x1x8x8xbf16> to vector<8x8xbf16>
    %67 = vector.shape_cast %64 : vector<8x8xbf16> to vector<1x1x8x8xbf16>
    tpu.vector_store %arg9[%c0_34, %c1_35, %c0_36, %c0_37], %67 {strides = array<i32>} : memref<1x4x8x8xbf16, #tpu.memory_space<vmem>>, vector<1x1x8x8xbf16>,
    %68 = vector.extract_strided_slice %37 {offsets = [0, 16], sizes = [8, 8], strides = [1, 1]} : vector<8x96xf32> to vector<8x8xf32>
    %69 = arith.truncf %68 : vector<8x8xf32> to vector<8x8xbf16>
    %c0_38 = arith.constant 0 : index
    %c2 = arith.constant 2 : index
    %c0_39 = arith.constant 0 : index
    %c0_40 = arith.constant 0 : index
    %70 = vector.load %arg7[%c0_38, %c2, %c0_39, %c0_40] : memref<1x4x8x8xbf16, #tpu.memory_space<vmem>>, vector<1x1x8x8xbf16>
    %71 = vector.shape_cast %70 : vector<1x1x8x8xbf16> to vector<8x8xbf16>
    %72 = vector.shape_cast %69 : vector<8x8xbf16> to vector<1x1x8x8xbf16>
    tpu.vector_store %arg7[%c0_38, %c2, %c0_39, %c0_40], %72 {strides = array<i32>} : memref<1x4x8x8xbf16, #tpu.memory_space<vmem>>, vector<1x1x8x8xbf16>,
    %73 = vector.extract_strided_slice %37 {offsets = [0, 48], sizes = [8, 8], strides = [1, 1]} : vector<8x96xf32> to vector<8x8xf32>
    %74 = arith.truncf %73 : vector<8x8xf32> to vector<8x8xbf16>
    %c0_41 = arith.constant 0 : index
    %c2_42 = arith.constant 2 : index
    %c0_43 = arith.constant 0 : index
    %c0_44 = arith.constant 0 : index
    %75 = vector.load %arg8[%c0_41, %c2_42, %c0_43, %c0_44] : memref<1x4x8x8xbf16, #tpu.memory_space<vmem>>, vector<1x1x8x8xbf16>
    %76 = vector.shape_cast %75 : vector<1x1x8x8xbf16> to vector<8x8xbf16>
    %77 = vector.shape_cast %74 : vector<8x8xbf16> to vector<1x1x8x8xbf16>
    tpu.vector_store %arg8[%c0_41, %c2_42, %c0_43, %c0_44], %77 {strides = array<i32>} : memref<1x4x8x8xbf16, #tpu.memory_space<vmem>>, vector<1x1x8x8xbf16>,
    %78 = vector.extract_strided_slice %37 {offsets = [0, 80], sizes = [8, 8], strides = [1, 1]} : vector<8x96xf32> to vector<8x8xf32>
    %79 = arith.truncf %78 : vector<8x8xf32> to vector<8x8xbf16>
    %c0_45 = arith.constant 0 : index
    %c2_46 = arith.constant 2 : index
    %c0_47 = arith.constant 0 : index
    %c0_48 = arith.constant 0 : index
    %80 = vector.load %arg9[%c0_45, %c2_46, %c0_47, %c0_48] : memref<1x4x8x8xbf16, #tpu.memory_space<vmem>>, vector<1x1x8x8xbf16>
    %81 = vector.shape_cast %80 : vector<1x1x8x8xbf16> to vector<8x8xbf16>
    %82 = vector.shape_cast %79 : vector<8x8xbf16> to vector<1x1x8x8xbf16>
    tpu.vector_store %arg9[%c0_45, %c2_46, %c0_47, %c0_48], %82 {strides = array<i32>} : memref<1x4x8x8xbf16, #tpu.memory_space<vmem>>, vector<1x1x8x8xbf16>,
    %83 = vector.extract_strided_slice %37 {offsets = [0, 24], sizes = [8, 8], strides = [1, 1]} : vector<8x96xf32> to vector<8x8xf32>
    %84 = arith.truncf %83 : vector<8x8xf32> to vector<8x8xbf16>
    %c0_49 = arith.constant 0 : index
    %c3 = arith.constant 3 : index
    %c0_50 = arith.constant 0 : index
    %c0_51 = arith.constant 0 : index
    %85 = vector.load %arg7[%c0_49, %c3, %c0_50, %c0_51] : memref<1x4x8x8xbf16, #tpu.memory_space<vmem>>, vector<1x1x8x8xbf16>
    %86 = vector.shape_cast %85 : vector<1x1x8x8xbf16> to vector<8x8xbf16>
    %87 = vector.shape_cast %84 : vector<8x8xbf16> to vector<1x1x8x8xbf16>
    tpu.vector_store %arg7[%c0_49, %c3, %c0_50, %c0_51], %87 {strides = array<i32>} : memref<1x4x8x8xbf16, #tpu.memory_space<vmem>>, vector<1x1x8x8xbf16>,
    %88 = vector.extract_strided_slice %37 {offsets = [0, 56], sizes = [8, 8], strides = [1, 1]} : vector<8x96xf32> to vector<8x8xf32>
    %89 = arith.truncf %88 : vector<8x8xf32> to vector<8x8xbf16>
    %c0_52 = arith.constant 0 : index
    %c3_53 = arith.constant 3 : index
    %c0_54 = arith.constant 0 : index
    %c0_55 = arith.constant 0 : index
    %90 = vector.load %arg8[%c0_52, %c3_53, %c0_54, %c0_55] : memref<1x4x8x8xbf16, #tpu.memory_space<vmem>>, vector<1x1x8x8xbf16>
    %91 = vector.shape_cast %90 : vector<1x1x8x8xbf16> to vector<8x8xbf16>
    %92 = vector.shape_cast %89 : vector<8x8xbf16> to vector<1x1x8x8xbf16>
    tpu.vector_store %arg8[%c0_52, %c3_53, %c0_54, %c0_55], %92 {strides = array<i32>} : memref<1x4x8x8xbf16, #tpu.memory_space<vmem>>, vector<1x1x8x8xbf16>,
    %93 = vector.extract_strided_slice %37 {offsets = [0, 88], sizes = [8, 8], strides = [1, 1]} : vector<8x96xf32> to vector<8x8xf32>
    %94 = arith.truncf %93 : vector<8x8xf32> to vector<8x8xbf16>
    %c0_56 = arith.constant 0 : index
    %c3_57 = arith.constant 3 : index
    %c0_58 = arith.constant 0 : index
    %c0_59 = arith.constant 0 : index
    %95 = vector.load %arg9[%c0_56, %c3_57, %c0_58, %c0_59] : memref<1x4x8x8xbf16, #tpu.memory_space<vmem>>, vector<1x1x8x8xbf16>
    %96 = vector.shape_cast %95 : vector<1x1x8x8xbf16> to vector<8x8xbf16>
    %97 = vector.shape_cast %94 : vector<8x8xbf16> to vector<1x1x8x8xbf16>
    tpu.vector_store %arg9[%c0_56, %c3_57, %c0_58, %c0_59], %97 {strides = array<i32>} : memref<1x4x8x8xbf16, #tpu.memory_space<vmem>>, vector<1x1x8x8xbf16>,
    return
  }
  func.func @transform_0(%arg0: i32, %arg1: i32) -> (i32, i32, i32) {
    %c0_i32 = arith.constant 0 : i32
    %c0_i32_0 = arith.constant 0 : i32
    return %arg0, %arg1, %c0_i32 : i32, i32, i32
  }
  func.func @transform_1(%arg0: i32, %arg1: i32) -> (i32, i32) {
    %c0_i32 = arith.constant 0 : i32
    %c0_i32_0 = arith.constant 0 : i32
    %c0_i32_1 = arith.constant 0 : i32
    return %c0_i32, %c0_i32_0 : i32, i32
  }
  func.func @transform_2(%arg0: i32, %arg1: i32) -> (i32, i32) {
    %c0_i32 = arith.constant 0 : i32
    %c0_i32_0 = arith.constant 0 : i32
    %c0_i32_1 = arith.constant 0 : i32
    return %c0_i32, %c0_i32_0 : i32, i32
  }
  func.func @transform_3(%arg0: i32, %arg1: i32) -> (i32, i32) {
    %c0_i32 = arith.constant 0 : i32
    %c0_i32_0 = arith.constant 0 : i32
    %c0_i32_1 = arith.constant 0 : i32
    return %c0_i32, %c0_i32_0 : i32, i32
  }
  func.func @transform_4(%arg0: i32, %arg1: i32) -> (i32, i32) {
    %c0_i32 = arith.constant 0 : i32
    %c0_i32_0 = arith.constant 0 : i32
    %c0_i32_1 = arith.constant 0 : i32
    return %c0_i32, %c0_i32_0 : i32, i32
  }
  func.func @transform_5(%arg0: i32, %arg1: i32) -> (i32, i32, i32, i32) {
    %c0_i32 = arith.constant 0 : i32
    %c0_i32_0 = arith.constant 0 : i32
    %c0_i32_1 = arith.constant 0 : i32
    return %arg0, %c0_i32, %arg1, %c0_i32_0 : i32, i32, i32, i32
  }
  func.func @transform_6(%arg0: i32, %arg1: i32) -> (i32, i32, i32, i32) {
    %c0_i32 = arith.constant 0 : i32
    %c0_i32_0 = arith.constant 0 : i32
    %c0_i32_1 = arith.constant 0 : i32
    return %arg0, %c0_i32, %arg1, %c0_i32_0 : i32, i32, i32, i32
  }
  func.func @transform_7(%arg0: i32, %arg1: i32) -> (i32, i32, i32, i32) {
    %c0_i32 = arith.constant 0 : i32
    %c0_i32_0 = arith.constant 0 : i32
    %c0_i32_1 = arith.constant 0 : i32
    return %arg0, %c0_i32, %arg1, %c0_i32_0 : i32, i32, i32, i32
  }
}

</mosaic_0001>

<llo_original>
// kernel: tpu_custom_call.1
$region0: #{tpu_custom_call.1}
  #allocation0 [shape = 'u32[]', space=smem, size = 0x4, offset = 0x4, fixed_abs, tag = 'smem constant byte address 0x4 - core index']
  #allocation1 [shape = 'u32[72,128]{1,0:T(1,128)}', space=vmem, size = 0x9000, scoped, tag = 'internal scratch']
  %s0 = inlined_call_operand.hbm [shape: f32[2,8,32], index: 0, kind: input, shape index: {}]
  %s1 = inlined_call_operand.hbm [shape: f32[1,32], index: 1, kind: input, shape index: {}]
  %s2 = inlined_call_operand.vmem [shape: f32[1,32], index: 2, kind: input, shape index: {}]
  %s3 = inlined_call_operand.hbm [shape: bf16[32,96], index: 3, kind: input, shape index: {}]
  %s4 = inlined_call_operand.vmem [shape: f32[1,96], index: 4, kind: input, shape index: {}]
  %s5 = inlined_call_operand.hbm [shape: bf16[2,4,8,8], index: 5, kind: output, shape index: {0}]
  %s6 = inlined_call_operand.hbm [shape: bf16[2,4,8,8], index: 6, kind: output, shape index: {1}]
  %s7 = inlined_call_operand.hbm [shape: bf16[2,4,8,8], index: 7, kind: output, shape index: {2}]
  %8 = xla_tuple %s5, %s6, %s7
  %s9 = sld [smem:[#allocation0]]
  $region81: #{tpu_custom_call.1} parent=0
    _
  %s11 = ssub.s32 1, %s9
  %s12 = scalar_select 0, %s11, %s9
  $region1: #{tpu_custom_call.1} parent=0
    #allocation2 [shape = 'u8[8192]{0}', space=vmem, size = 0x2000, scoped, tag = 'input window, operand 0']
    #allocation3 [shape = 's32[2]{0}', space=sflag, size = 0x8, scoped, tag = 'scoped memory for tpu_custom_call.1']
    #allocation4 [shape = 's32[2]{0}', space=sflag, size = 0x8, scoped, tag = 'scoped memory for tpu_custom_call.1']
    #allocation5 [shape = 'u8[512]{0}', space=vmem, size = 0x400, scoped, tag = 'input window, operand 1, single buffered']
    #allocation6 [shape = 's32[1]{0}', space=sflag, size = 0x4, scoped, tag = 'scoped memory for tpu_custom_call.1']
    #allocation7 [shape = 'u8[8192]{0}', space=vmem, size = 0x2000, scoped, tag = 'input window, operand 3, single buffered']
    #allocation8 [shape = 'u8[16384]{0}', space=vmem, size = 0x4000, scoped, tag = 'output window, operand 0']
    #allocation9 [shape = 'u8[16384]{0}', space=vmem, size = 0x4000, scoped, tag = 'output window, operand 1']
    #allocation10 [shape = 's32[2]{0}', space=sflag, size = 0x8, scoped, tag = 'scoped memory for tpu_custom_call.1']
    #allocation11 [shape = 'u8[16384]{0}', space=vmem, size = 0x4000, scoped, tag = 'output window, operand 2']
    %13 = vsyncpa [#allocation3], 0
    %s14 = scalar_lea.sflag [#allocation3], 1
    %15 = vsyncpa %s14, 0
    %16 = vsyncpa [#allocation6], 0
    %17 = vsyncpa [#allocation4], 0
    %s18 = scalar_lea.sflag [#allocation4], 1
    %19 = vsyncpa %s18, 0
    %20 = vsyncpa [#allocation10], 0
    %s21 = scalar_lea.sflag [#allocation10], 1
    %22 = vsyncpa %s21, 0
    loop: start=0, step=1, limit=4
    $region2: #{tpu_custom_call.1} parent=1 // loop_pre_header
      _
    $region3: #{tpu_custom_call.1} parent=1 // loop_header
      %s24 = sphi 0, %s28
      %p25 = scmp.ge.s32.totalorder %s24, 4
      %s31 = sphi 0, %s43
      %s32 = sphi 0, %s39
      %s33 = sphi 0, %s31
      %s34 = sphi 0, %s32
      %s35 = sphi 0, %s33
      %s36 = sphi 0, %s34
      %s48 = sphi 0, %s50
      %s51 = sphi 0, %s48
      %s52 = sphi 0, %s51
      %s68 = sphi 0, %s52
      %s72 = sphi 0, %s72
      %s74 = sphi 0, %s72
      %s75 = sphi 0, %s74
      %s89 = sphi 0, %s75
      %s93 = sphi 0, %s93
      %s95 = sphi 0, %s93
      %s96 = sphi 0, %s95
      %s110 = sphi 0, %s96
      %s114 = sphi 0, %s114
      %s116 = sphi 0, %s114
      %s117 = sphi 0, %s116
      %s131 = sphi 0, %s117
      %s135 = sphi 0, %s135
      %s137 = sphi 0, %s135
      %s138 = sphi 0, %s137
      %s152 = sphi 0, %s138
      %s160 = sphi 0, %s162
      %s163 = sphi 0, %s160
      %s164 = sphi 0, %s163
      %s180 = sphi 0, %s164
      %s188 = sphi 0, %s190
      %s191 = sphi 0, %s188
      %s192 = sphi 0, %s191
      %s208 = sphi 0, %s192
      %s216 = sphi 0, %s218
      %s219 = sphi 0, %s216
      %s220 = sphi 0, %s219
      %s236 = sphi 0, %s220
    $region4: #{tpu_custom_call.1} parent=1 // loop_header_branch
      %27 = sbr.rel (%p25) target = $region8
    $region5: #{tpu_custom_call.1} parent=1 // loop_body
      %s29 = ssub.s32 %s24, 1
      %s30 = ssub.s32 %s24, 2
      %s37 = sadd.s32 1, %s32
      %p38 = scmp.ge.s32.totalorder %s37, 1
      %s39 = scalar_select %p38, 0, %s37
      %s40 = sadd.s32 1, %s31
      %s41 = scalar_select %p38, %s40, %s31
      %p42 = scmp.ge.s32.totalorder %s41, 2
      %s43 = scalar_select %p42, 0, %s41
      %s44 = ssub.s32 %s31, %s43
      %s45 = ssub.s32 %s32, %s39
      %s46 = sor.u32 %s44, %s45
      %p47 = scmp.eq.s32.totalorder %s46, 0
      %s49 = sadd.s32 %s48, 1
      %s50 = scalar_select %p47, %s48, %s49
      %p53 = pneg %p47
      %p54 = scmp.eq.s32.totalorder %s24, 1
      %p55 = por %p53, %p54
      %p56 = scmp.ne.s32.totalorder %s48, %s51
      %p57 = scmp.eq.s32.totalorder %s24, 0
      %p58 = por %p56, %p57
      %p59 = scmp.ne.s32.totalorder %s48, %s51
      %p60 = scmp.eq.s32.totalorder %s29, 1
      %p61 = por %p59, %p60
      %p62 = scmp.ne.s32.totalorder %s51, %s52
      %p63 = scmp.eq.s32.totalorder %s29, 0
      %p64 = por %p62, %p63
      %p65 = scmp.ne.s32.totalorder %s51, %s52
      %p66 = scmp.eq.s32.totalorder %s30, 1
      %p67 = por %p65, %p66
      %p69 = scmp.ne.s32.totalorder %s52, %s68
      %p70 = scmp.eq.s32.totalorder %s30, 0
      %p71 = por %p69, %p70
      %s73 = sadd.s32 %s72, 1
      %p76 = scmp.eq.s32.totalorder %s24, 1
      %p77 = scmp.ne.s32.totalorder %s72, %s74
      %p78 = scmp.eq.s32.totalorder %s24, 0
      %p79 = por %p77, %p78
      %p80 = scmp.ne.s32.totalorder %s72, %s74
      %p81 = scmp.eq.s32.totalorder %s29, 1
      %p82 = por %p80, %p81
      %p83 = scmp.ne.s32.totalorder %s74, %s75
      %p84 = scmp.eq.s32.totalorder %s29, 0
      %p85 = por %p83, %p84
      %p86 = scmp.ne.s32.totalorder %s74, %s75
      %p87 = scmp.eq.s32.totalorder %s30, 1
      %p88 = por %p86, %p87
      %p90 = scmp.ne.s32.totalorder %s75, %s89
      %p91 = scmp.eq.s32.totalorder %s30, 0
      %p92 = por %p90, %p91
      %s94 = sadd.s32 %s93, 1
      %p97 = scmp.eq.s32.totalorder %s24, 1
      %p98 = scmp.ne.s32.totalorder %s93, %s95
      %p99 = scmp.eq.s32.totalorder %s24, 0
      %p100 = por %p98, %p99
      %p101 = scmp.ne.s32.totalorder %s93, %s95
      %p102 = scmp.eq.s32.totalorder %s29, 1
      %p103 = por %p101, %p102
      %p104 = scmp.ne.s32.totalorder %s95, %s96
      %p105 = scmp.eq.s32.totalorder %s29, 0
      %p106 = por %p104, %p105
      %p107 = scmp.ne.s32.totalorder %s95, %s96
      %p108 = scmp.eq.s32.totalorder %s30, 1
      %p109 = por %p107, %p108
      %p111 = scmp.ne.s32.totalorder %s96, %s110
      %p112 = scmp.eq.s32.totalorder %s30, 0
      %p113 = por %p111, %p112
      %s115 = sadd.s32 %s114, 1
      %p118 = scmp.eq.s32.totalorder %s24, 1
      %p119 = scmp.ne.s32.totalorder %s114, %s116
      %p120 = scmp.eq.s32.totalorder %s24, 0
      %p121 = por %p119, %p120
      %p122 = scmp.ne.s32.totalorder %s114, %s116
      %p123 = scmp.eq.s32.totalorder %s29, 1
      %p124 = por %p122, %p123
      %p125 = scmp.ne.s32.totalorder %s116, %s117
      %p126 = scmp.eq.s32.totalorder %s29, 0
      %p127 = por %p125, %p126
      %p128 = scmp.ne.s32.totalorder %s116, %s117
      %p129 = scmp.eq.s32.totalorder %s30, 1
      %p130 = por %p128, %p129
      %p132 = scmp.ne.s32.totalorder %s117, %s131
      %p133 = scmp.eq.s32.totalorder %s30, 0
      %p134 = por %p132, %p133
      %s136 = sadd.s32 %s135, 1
      %p139 = scmp.eq.s32.totalorder %s24, 1
      %p140 = scmp.ne.s32.totalorder %s135, %s137
      %p141 = scmp.eq.s32.totalorder %s24, 0
      %p142 = por %p140, %p141
      %p143 = scmp.ne.s32.totalorder %s135, %s137
      %p144 = scmp.eq.s32.totalorder %s29, 1
      %p145 = por %p143, %p144
      %p146 = scmp.ne.s32.totalorder %s137, %s138
      %p147 = scmp.eq.s32.totalorder %s29, 0
      %p148 = por %p146, %p147
      %p149 = scmp.ne.s32.totalorder %s137, %s138
      %p150 = scmp.eq.s32.totalorder %s30, 1
      %p151 = por %p149, %p150
      %p153 = scmp.ne.s32.totalorder %s138, %s152
      %p154 = scmp.eq.s32.totalorder %s30, 0
      %p155 = por %p153, %p154
      %s156 = ssub.s32 %s31, %s43
      %s157 = ssub.s32 %s32, %s39
      %s158 = sor.u32 %s156, %s157
      %p159 = scmp.eq.s32.totalorder %s158, 0
      %s161 = sadd.s32 %s160, 1
      %s162 = scalar_select %p159, %s160, %s161
      %p165 = pneg %p159
      %p166 = scmp.eq.s32.totalorder %s24, 1
      %p167 = por %p165, %p166
      %p168 = scmp.ne.s32.totalorder %s160, %s163
      %p169 = scmp.eq.s32.totalorder %s24, 0
      %p170 = por %p168, %p169
      %p171 = scmp.ne.s32.totalorder %s160, %s163
      %p172 = scmp.eq.s32.totalorder %s29, 1
      %p173 = por %p171, %p172
      %p174 = scmp.ne.s32.totalorder %s163, %s164
      %p175 = scmp.eq.s32.totalorder %s29, 0
      %p176 = por %p174, %p175
      %p177 = scmp.ne.s32.totalorder %s163, %s164
      %p178 = scmp.eq.s32.totalorder %s30, 1
      %p179 = por %p177, %p178
      %p181 = scmp.ne.s32.totalorder %s164, %s180
      %p182 = scmp.eq.s32.totalorder %s30, 0
      %p183 = por %p181, %p182
      %s184 = ssub.s32 %s31, %s43
      %s185 = ssub.s32 %s32, %s39
      %s186 = sor.u32 %s184, %s185
      %p187 = scmp.eq.s32.totalorder %s186, 0
      %s189 = sadd.s32 %s188, 1
      %s190 = scalar_select %p187, %s188, %s189
      %p193 = pneg %p187
      %p194 = scmp.eq.s32.totalorder %s24, 1
      %p195 = por %p193, %p194
      %p196 = scmp.ne.s32.totalorder %s188, %s191
      %p197 = scmp.eq.s32.totalorder %s24, 0
      %p198 = por %p196, %p197
      %p199 = scmp.ne.s32.totalorder %s188, %s191
      %p200 = scmp.eq.s32.totalorder %s29, 1
      %p201 = por %p199, %p200
      %p202 = scmp.ne.s32.totalorder %s191, %s192
      %p203 = scmp.eq.s32.totalorder %s29, 0
      %p204 = por %p202, %p203
      %p205 = scmp.ne.s32.totalorder %s191, %s192
      %p206 = scmp.eq.s32.totalorder %s30, 1
      %p207 = por %p205, %p206
      %p209 = scmp.ne.s32.totalorder %s192, %s208
      %p210 = scmp.eq.s32.totalorder %s30, 0
      %p211 = por %p209, %p210
      %s212 = ssub.s32 %s31, %s43
      %s213 = ssub.s32 %s32, %s39
      %s214 = sor.u32 %s212, %s213
      %p215 = scmp.eq.s32.totalorder %s214, 0
      %s217 = sadd.s32 %s216, 1
      %s218 = scalar_select %p215, %s216, %s217
      %p221 = pneg %p215
      %p222 = scmp.eq.s32.totalorder %s24, 1
      %p223 = por %p221, %p222
      %p224 = scmp.ne.s32.totalorder %s216, %s219
      %p225 = scmp.eq.s32.totalorder %s24, 0
      %p226 = por %p224, %p225
      %p227 = scmp.ne.s32.totalorder %s216, %s219
      %p228 = scmp.eq.s32.totalorder %s29, 1
      %p229 = por %p227, %p228
      %p230 = scmp.ne.s32.totalorder %s219, %s220
      %p231 = scmp.eq.s32.totalorder %s29, 0
      %p232 = por %p230, %p231
      %p233 = scmp.ne.s32.totalorder %s219, %s220
      %p234 = scmp.eq.s32.totalorder %s30, 1
      %p235 = por %p233, %p234
      %p237 = scmp.ne.s32.totalorder %s220, %s236
      %p238 = scmp.eq.s32.totalorder %s30, 0
      %p239 = por %p237, %p238
      %p240 = scmp.le.s32.totalorder 1, %s24
      %p241 = scmp.lt.s32.totalorder %s24, 3
      %p242 = pnand %p240, %p241
      %p243 = pneg %p242
      // Predicated region
      $region9: #{tpu_custom_call.1} parent=5 // pred_check
        _
      $region10: #{tpu_custom_call.1} parent=5 // pred_check_branch
        %245 = sbr.rel (%p242) target = $region12
      $region11: #{tpu_custom_call.1} parent=5 // pred_region
        %s246 = ssub.s32 %s24, 1
        // Predicated region
        $region13: #{tpu_custom_call.1} parent=11 // pred_check
          %p247 = pneg %p85
        $region14: #{tpu_custom_call.1} parent=11 // pred_check_branch
          %249 = sbr.rel (%p247) target = $region16
        $region15: #{tpu_custom_call.1} parent=11 // pred_region
          %251 = vsyncadd [#allocation6], 0
          %s253 = sshll.u32 %s1, 4
          %s254 = int_to_ptr.hbm [resolvable:$true] %s253
          %s255 = sshll.u32 [#allocation5], 4
          %s256 = int_to_ptr.vmem [resolvable:$true] %s255
          %258 = dma.hbm_to_vmem [thread:$0]  %s254, 16, %s256, [#allocation6]
        $region16: #{tpu_custom_call.1} parent=11 // pred_fallthru
          _
        // Predicated region
        $region17: #{tpu_custom_call.1} parent=11 // pred_check
          %p259 = pneg %p106
        $region18: #{tpu_custom_call.1} parent=11 // pred_check_branch
          %261 = sbr.rel (%p259) target = $region20
        $region19: #{tpu_custom_call.1} parent=11 // pred_region
          _
        $region20: #{tpu_custom_call.1} parent=11 // pred_fallthru
          _
        // Predicated region
        $region21: #{tpu_custom_call.1} parent=11 // pred_check
          %p262 = pneg %p127
        $region22: #{tpu_custom_call.1} parent=11 // pred_check_branch
          %264 = sbr.rel (%p262) target = $region24
        $region23: #{tpu_custom_call.1} parent=11 // pred_region
          %266 = vsyncadd [#allocation6], 0
          %s267 = sshll.u32 %s3, 4
          %s268 = int_to_ptr.hbm [resolvable:$true] %s267
          %s269 = sshll.u32 [#allocation7], 4
          %s270 = int_to_ptr.vmem [resolvable:$true] %s269
          %275 = dma.hbm_to_vmem [thread:$0]  %s268, 256, %s270, [#allocation6], 64, 64, 4
        $region24: #{tpu_custom_call.1} parent=11 // pred_fallthru
          _
        // Predicated region
        $region25: #{tpu_custom_call.1} parent=11 // pred_check
          %p276 = pneg %p148
        $region26: #{tpu_custom_call.1} parent=11 // pred_check_branch
          %278 = sbr.rel (%p276) target = $region28
        $region27: #{tpu_custom_call.1} parent=11 // pred_region
          _
        $region28: #{tpu_custom_call.1} parent=11 // pred_fallthru
          _
      $region12: #{tpu_custom_call.1} parent=5 // pred_fallthru
        _
      %p279 = scmp.lt.s32.totalorder %s24, 2
      // Predicated region
      $region29: #{tpu_custom_call.1} parent=5 // pred_check
        %p280 = pneg %p279
      $region30: #{tpu_custom_call.1} parent=5 // pred_check_branch
        %282 = sbr.rel (%p280) target = $region32
      $region31: #{tpu_custom_call.1} parent=5 // pred_region
        // Predicated region
        $region33: #{tpu_custom_call.1} parent=31 // pred_check
          %p283 = pneg %p58
        $region34: #{tpu_custom_call.1} parent=31 // pred_check_branch
          %285 = sbr.rel (%p283) target = $region36
        $region35: #{tpu_custom_call.1} parent=31 // pred_region
          %s286 = sand.u32 %s48, 1
          %s287 = scalar_lea.sflag [#allocation3], %s286
          %s288 = sand.u32 %s48, 1
          %s289 = smul.addr %s288, 8
          %s290 = scalar_lea.vmem [#allocation2], %s289
          %292 = vsyncadd %s287, 0
          %s293 = sadd.s32 %s32, %s31
          %s294 = smul.addr %s293, 8
          %s295 = scalar_lea.hbm %s0, %s294
          %s297 = sshll.u32 %s295, 4
          %s298 = int_to_ptr.hbm [resolvable:$true] %s297
          %s299 = sshll.u32 %s290, 4
          %s300 = int_to_ptr.vmem [resolvable:$true] %s299
          %302 = dma.hbm_to_vmem [thread:$0]  %s298, 128, %s300, %s287
        $region36: #{tpu_custom_call.1} parent=31 // pred_fallthru
          _
      $region32: #{tpu_custom_call.1} parent=5 // pred_fallthru
        _
      %p303 = scmp.le.s32.totalorder 1, %s24
      %p304 = scmp.lt.s32.totalorder %s24, 3
      %p305 = pnand %p303, %p304
      %p306 = pneg %p305
      // Predicated region
      $region37: #{tpu_custom_call.1} parent=5 // pred_check
        _
      $region38: #{tpu_custom_call.1} parent=5 // pred_check_branch
        %308 = sbr.rel (%p305) target = $region40
      $region39: #{tpu_custom_call.1} parent=5 // pred_region
        %s309 = ssub.s32 %s24, 1
        %s310 = sand.u32 %s51, 1
        %s311 = scalar_lea.sflag [#allocation3], %s310
        %s312 = sand.u32 %s51, 1
        %s313 = smul.addr %s312, 8
        %s314 = scalar_lea.vmem [#allocation2], %s313
        // Predicated region
        $region41: #{tpu_custom_call.1} parent=39 // pred_check
          %p315 = pneg %p64
        $region42: #{tpu_custom_call.1} parent=39 // pred_check_branch
          %317 = sbr.rel (%p315) target = $region44
        $region43: #{tpu_custom_call.1} parent=39 // pred_region
          %319 = dma.done %s311, 128
        $region44: #{tpu_custom_call.1} parent=39 // pred_fallthru
          _
        // Predicated region
        $region45: #{tpu_custom_call.1} parent=39 // pred_check
          %p320 = pneg %p85
        $region46: #{tpu_custom_call.1} parent=39 // pred_check_branch
          %322 = sbr.rel (%p320) target = $region48
        $region47: #{tpu_custom_call.1} parent=39 // pred_region
          %324 = dma.done [#allocation6], 16
        $region48: #{tpu_custom_call.1} parent=39 // pred_fallthru
          _
        // Predicated region
        $region49: #{tpu_custom_call.1} parent=39 // pred_check
          %p325 = pneg %p127
        $region50: #{tpu_custom_call.1} parent=39 // pred_check_branch
          %327 = sbr.rel (%p325) target = $region52
        $region51: #{tpu_custom_call.1} parent=39 // pred_region
          %329 = dma.done [#allocation6], 256
        $region52: #{tpu_custom_call.1} parent=39 // pred_fallthru
          _
        %s330 = sand.u32 %s51, 1
        %s331 = scalar_lea.sflag [#allocation3], %s330
        %s332 = sand.u32 %s51, 1
        %s333 = smul.addr %s332, 8
        %s334 = scalar_lea.vmem [#allocation2], %s333
        %p335 = pneg %p64
        %p336 = pneg %p61
        %p337 = pneg %p85
        %p338 = pneg %p82
        %p339 = pneg %p106
        %p340 = pneg %p103
        %p341 = pneg %p127
        %p342 = pneg %p124
        %p343 = pneg %p148
        %p344 = pneg %p145
        %p345 = pneg %p176
        %p346 = pneg %p173
        %s347 = sand.u32 %s163, 1
        %s348 = scalar_lea.sflag [#allocation4], %s347
        %s349 = sand.u32 %s163, 1
        %s350 = smul.addr %s349, 16
        %s351 = scalar_lea.vmem [#allocation8], %s350
        %p352 = pneg %p204
        %p353 = pneg %p201
        %s354 = sand.u32 %s29, 1
        %s355 = scalar_lea.sflag [#allocation10], %s354
        %s356 = sand.u32 %s191, 1
        %s357 = smul.addr %s356, 16
        %s358 = scalar_lea.vmem [#allocation9], %s357
        %p359 = pneg %p232
        %p360 = pneg %p229
        %s361 = sand.u32 %s29, 1
        %s362 = scalar_lea.sflag [#allocation10], %s361
        %s363 = sand.u32 %s219, 1
        %s364 = smul.addr %s363, 16
        %s365 = scalar_lea.vmem [#allocation11], %s364
        %v367 = vld [vmem:[%s314] sm:$0xff]
        %v368 = vld [vmem:[#allocation5] sm:$0x1]
        %v369 = vld [vmem:[%s2] sm:$0x1]
        %vm370 = vcmask 261120
        %v371 = vsel %vm370, %v367, 0.0
        %372 = vadd.xlane.f32.xlu0 %v371
        %v373 = vpop.xlane.xlu0 %372
        %v374 = vrcp.pop 32.0
        %v375 = vmul.f32 32.0, %v374
        %v376 = vsub.f32 1.0, %v375
        %v377 = vmul.f32 %v374, %v376
        %v378 = vadd.f32 %v374, %v377
        %vm379 = vweird.f32 %v374
        %v380 = vsel %vm379, %v374, %v378
        %v381 = vmul.f32 %v373, %v380
        %v382 = vsub.f32 %v367, %v381
        %v383 = vmul.f32 %v382, %v382
        %v384 = vsel %vm370, %v383, 0.0
        %385 = vadd.xlane.f32.xlu0 %v384
        %v386 = vpop.xlane.xlu0 %385
        %v387 = vmul.f32 %v386, %v380
        %v388 = vadd.f32 %v387, 1e-05
        %v389 = vrsqrt.pop %v388
        %v390 = vmul.f32 %v389, %v388
        %v391 = vmul.f32 %v390, %v389
        %v392 = vmul.f32 0.5, %v391
        %v393 = vsub.f32 1.5, %v392
        %v394 = vmul.f32 %v389, %v393
        %vm395 = vweird.f32 %v388
        %vm396 = vweird.f32 %v389
        %vm397 = vmor %vm395, %vm396
        %v398 = vsel %vm397, %v389, %v394
        %v399 = vmul.f32 %v382, %v398
        %v401 = vperm.slane %v368, 0
        %v403 = vmul.f32 %v399, %v401
        %v405 = vperm.slane %v369, 0
        %v407 = vadd.f32 %v403, %v405
        %v408 = vpack.c.bf16 %v407, %v407
        %v409 = vld [vmem:[#allocation7] sm:$0xf]
        %v410 = vld [vmem:[#allocation7 + $0x4] sm:$0xf]
        %v411 = vld [vmem:[#allocation7 + $0x8] sm:$0xf]
        %v412 = vld [vmem:[#allocation7 + $0xc] sm:$0xf]
        %v413 = vld [vmem:[%s4] sm:$0x1]
        %v415 = vperm.slane %v413, 0
        %v421 = vunpack.c.l.b16 %v409
        %v422 = vunpack.c.l.b16 %v410
        %v423 = vunpack.c.l.b16 %v411
        %v424 = vunpack.c.l.b16 %v412
        %v425 = vpack.c.b16 %v422, %v421
        %v426 = vpack.c.b16 %v424, %v423
        %v430 = vsel %vm370, %v408, 0
        %432 = vmatpush.bf16.msra.mxu0 0
        %433 = vmatpush.bf16.msra.mxu0 0
        %434 = vmatpush.bf16.msra.mxu0 0
        %435 = vmatpush.bf16.msra.mxu0 0
        %436 = vmatpush.bf16.msra.mxu0 0
        %437 = vmatpush.bf16.msra.mxu0 0
        %438 = vmatpush.bf16.msra.mxu0 %v426
        %439 = vmatpush.bf16.msra.mxu0 %v425
        %440 = vmatmul.bf16.gmra.mxu0 %v430
        %v441 = vpop.f32.mrf.mxu0
        %v442 = vadd.f32 %v415, %v441
        %v443 = vpop.f32.mrf.mxu0
        %444 = vdwg.mxu0
        %v445 = vpack.c.bf16 %v442, %v442
        %vm446 = vcmask 60416
        %447 = vst.msk [vmem:[%s351] sm:$0xf] %vm446, %v445
        %449 = vrot.lane.b32.xlu0 %v445, 96
        %v450 = vpop.permute.xlu0 %449
        %452 = vst.msk [vmem:[%s358] sm:$0xf] %vm446, %v450
        %453 = vrot.lane.b32.xlu0 %v445, 64
        %v454 = vpop.permute.xlu0 %453
        %456 = vst.msk [vmem:[%s365] sm:$0xf] %vm446, %v454
        %457 = vrot.lane.b32.xlu0 %v445, 120
        %v458 = vpop.permute.xlu0 %457
        %s460 = scalar_lea.vmem %s351, 4 [#allocation8]
        %461 = vst.msk [vmem:[%s460] sm:$0xf] %vm446, %v458
        %462 = vrot.lane.b32.xlu0 %v445, 88
        %v463 = vpop.permute.xlu0 %462
        %s465 = scalar_lea.vmem %s358, 4 [#allocation9]
        %466 = vst.msk [vmem:[%s465] sm:$0xf] %vm446, %v463
        %467 = vrot.lane.b32.xlu0 %v445, 56
        %v468 = vpop.permute.xlu0 %467
        %s470 = scalar_lea.vmem %s365, 4 [#allocation11]
        %471 = vst.msk [vmem:[%s470] sm:$0xf] %vm446, %v468
        %472 = vrot.lane.b32.xlu0 %v445, 112
        %v473 = vpop.permute.xlu0 %472
        %s475 = scalar_lea.vmem %s351, 8 [#allocation8]
        %476 = vst.msk [vmem:[%s475] sm:$0xf] %vm446, %v473
        %477 = vrot.lane.b32.xlu0 %v445, 80
        %v478 = vpop.permute.xlu0 %477
        %s480 = scalar_lea.vmem %s358, 8 [#allocation9]
        %481 = vst.msk [vmem:[%s480] sm:$0xf] %vm446, %v478
        %482 = vrot.lane.b32.xlu0 %v445, 48
        %v483 = vpop.permute.xlu0 %482
        %s485 = scalar_lea.vmem %s365, 8 [#allocation11]
        %486 = vst.msk [vmem:[%s485] sm:$0xf] %vm446, %v483
        %487 = vrot.lane.b32.xlu0 %v445, 104
        %v488 = vpop.permute.xlu0 %487
        %s490 = scalar_lea.vmem %s351, 12 [#allocation8]
        %491 = vst.msk [vmem:[%s490] sm:$0xf] %vm446, %v488
        %492 = vrot.lane.b32.xlu0 %v445, 72
        %v493 = vpop.permute.xlu0 %492
        %s495 = scalar_lea.vmem %s358, 12 [#allocation9]
        %496 = vst.msk [vmem:[%s495] sm:$0xf] %vm446, %v493
        %497 = vrot.lane.b32.xlu0 %v445, 40
        %v498 = vpop.permute.xlu0 %497
        %s500 = scalar_lea.vmem %s365, 12 [#allocation11]
        %501 = vst.msk [vmem:[%s500] sm:$0xf] %vm446, %v498
        %s502 = sand.u32 %s163, 1
        %s503 = scalar_lea.sflag [#allocation4], %s502
        %s504 = sand.u32 %s163, 1
        %s505 = smul.addr %s504, 16
        %s506 = scalar_lea.vmem [#allocation8], %s505
        %s507 = sand.u32 %s29, 1
        %s508 = scalar_lea.sflag [#allocation10], %s507
        %s509 = sand.u32 %s191, 1
        %s510 = smul.addr %s509, 16
        %s511 = scalar_lea.vmem [#allocation9], %s510
        %s512 = sand.u32 %s29, 1
        %s513 = scalar_lea.sflag [#allocation10], %s512
        %s514 = sand.u32 %s219, 1
        %s515 = smul.addr %s514, 16
        %s516 = scalar_lea.vmem [#allocation11], %s515
        // Predicated region
        $region53: #{tpu_custom_call.1} parent=39 // pred_check
          %p517 = pneg %p173
        $region54: #{tpu_custom_call.1} parent=39 // pred_check_branch
          %519 = sbr.rel (%p517) target = $region56
        $region55: #{tpu_custom_call.1} parent=39 // pred_region
          %521 = vsyncadd %s503, 0
          %s522 = smul.addr %s33, 4
          %s523 = sadd.s32 %s34, %s522
          %s524 = smul.addr %s523, 4
          %s525 = scalar_lea.hbm %s5, %s524
          %s526 = sshll.u32 %s506, 4
          %s527 = int_to_ptr.vmem [resolvable:$true] %s526
          %s528 = sshll.u32 %s525, 4
          %s529 = int_to_ptr.hbm [resolvable:$true] %s528
          %534 = dma.vmem_to_hbm [thread:$0]  %s527, 256, %s529, %s503, 64, 64, 4
        $region56: #{tpu_custom_call.1} parent=39 // pred_fallthru
          _
        // Predicated region
        $region57: #{tpu_custom_call.1} parent=39 // pred_check
          %p535 = pneg %p201
        $region58: #{tpu_custom_call.1} parent=39 // pred_check_branch
          %537 = sbr.rel (%p535) target = $region60
        $region59: #{tpu_custom_call.1} parent=39 // pred_region
          %539 = vsyncadd %s508, 0
          %s540 = smul.addr %s33, 4
          %s541 = sadd.s32 %s34, %s540
          %s542 = smul.addr %s541, 4
          %s543 = scalar_lea.hbm %s6, %s542
          %s544 = sshll.u32 %s511, 4
          %s545 = int_to_ptr.vmem [resolvable:$true] %s544
          %s546 = sshll.u32 %s543, 4
          %s547 = int_to_ptr.hbm [resolvable:$true] %s546
          %552 = dma.vmem_to_hbm [thread:$0]  %s545, 256, %s547, %s508, 64, 64, 4
        $region60: #{tpu_custom_call.1} parent=39 // pred_fallthru
          _
        // Predicated region
        $region61: #{tpu_custom_call.1} parent=39 // pred_check
          %p553 = pneg %p229
        $region62: #{tpu_custom_call.1} parent=39 // pred_check_branch
          %555 = sbr.rel (%p553) target = $region64
        $region63: #{tpu_custom_call.1} parent=39 // pred_region
          %557 = vsyncadd %s513, 0
          %s558 = smul.addr %s33, 4
          %s559 = sadd.s32 %s34, %s558
          %s560 = smul.addr %s559, 4
          %s561 = scalar_lea.hbm %s7, %s560
          %s562 = sshll.u32 %s516, 4
          %s563 = int_to_ptr.vmem [resolvable:$true] %s562
          %s564 = sshll.u32 %s561, 4
          %s565 = int_to_ptr.hbm [resolvable:$true] %s564
          %570 = dma.vmem_to_hbm [thread:$0]  %s563, 256, %s565, %s513, 64, 64, 4
        $region64: #{tpu_custom_call.1} parent=39 // pred_fallthru
          _
      $region40: #{tpu_custom_call.1} parent=5 // pred_fallthru
        _
      %p571 = scmp.le.s32.totalorder 2, %s24
      // Predicated region
      $region65: #{tpu_custom_call.1} parent=5 // pred_check
        %p572 = pneg %p571
      $region66: #{tpu_custom_call.1} parent=5 // pred_check_branch
        %574 = sbr.rel (%p572) target = $region68
      $region67: #{tpu_custom_call.1} parent=5 // pred_region
        %s575 = ssub.s32 %s24, 2
        // Predicated region
        $region69: #{tpu_custom_call.1} parent=67 // pred_check
          %p576 = pneg %p179
        $region70: #{tpu_custom_call.1} parent=67 // pred_check_branch
          %578 = sbr.rel (%p576) target = $region72
        $region71: #{tpu_custom_call.1} parent=67 // pred_region
          %s579 = sand.u32 %s164, 1
          %s580 = scalar_lea.sflag [#allocation4], %s579
          %s581 = sand.u32 %s164, 1
          %s582 = smul.addr %s581, 16
          %s583 = scalar_lea.vmem [#allocation8], %s582
          %585 = dma.done %s580, 256
        $region72: #{tpu_custom_call.1} parent=67 // pred_fallthru
          _
        // Predicated region
        $region73: #{tpu_custom_call.1} parent=67 // pred_check
          %p586 = pneg %p207
        $region74: #{tpu_custom_call.1} parent=67 // pred_check_branch
          %588 = sbr.rel (%p586) target = $region76
        $region75: #{tpu_custom_call.1} parent=67 // pred_region
          %s589 = sand.u32 %s30, 1
          %s590 = scalar_lea.sflag [#allocation10], %s589
          %s591 = sand.u32 %s192, 1
          %s592 = smul.addr %s591, 16
          %s593 = scalar_lea.vmem [#allocation9], %s592
          %595 = dma.done %s590, 256
        $region76: #{tpu_custom_call.1} parent=67 // pred_fallthru
          _
        // Predicated region
        $region77: #{tpu_custom_call.1} parent=67 // pred_check
          %p596 = pneg %p235
        $region78: #{tpu_custom_call.1} parent=67 // pred_check_branch
          %598 = sbr.rel (%p596) target = $region80
        $region79: #{tpu_custom_call.1} parent=67 // pred_region
          %s599 = sand.u32 %s30, 1
          %s600 = scalar_lea.sflag [#allocation10], %s599
          %s601 = sand.u32 %s220, 1
          %s602 = smul.addr %s601, 16
          %s603 = scalar_lea.vmem [#allocation11], %s602
          %605 = dma.done %s600, 256
        $region80: #{tpu_custom_call.1} parent=67 // pred_fallthru
          _
      $region68: #{tpu_custom_call.1} parent=5 // pred_fallthru
        _
    $region6: #{tpu_custom_call.1} parent=1 // loop_footer
      %s28 = sadd.s32 1, %s24
    $region7: #{tpu_custom_call.1} parent=1 // loop_footer_branch
      %23 = sbr.rel target = $region3
    $region8: #{tpu_custom_call.1} parent=1 // loop_exit
      _
    %606 = vsyncpa [#allocation3], 1
    %s607 = scalar_lea.sflag [#allocation3], 1
    %608 = vsyncpa %s607, 1
    %609 = vsyncpa [#allocation6], 1
    %610 = vsyncpa [#allocation4], 1
    %s611 = scalar_lea.sflag [#allocation4], 1
    %612 = vsyncpa %s611, 1
    %613 = vsyncpa [#allocation10], 1
    %s614 = scalar_lea.sflag [#allocation10], 1
    %615 = vsyncpa %s614, 1

</llo_original>
